<compile_context>
chip_gen: v6e
topology: v6e:2x2x1
jax: 0.10.0
libtpu: 0.0.40
codegen_flags: <defaults>
</compile_context>

<pallas_src>
import jax
import jax.numpy as jnp
from jax.experimental import pallas as pl
from jax.experimental.pallas import tpu as pltpu

EPS = 1e-05


def _beens_layernorm_kernel(x_ref, scale_ref, shift_ref, o_ref):
    x = x_ref[...].astype(jnp.float32)                       # (rows, D)
    d = x.shape[1]
    s1 = jnp.sum(x, axis=1, keepdims=True)                   # XLU reduction
    s2 = jnp.sum(x * x, axis=1, keepdims=True)                # XLU reduction
    mean = s1 * (1.0 / d)
    # Unbiased variance (torch.var default): sum((x-mean)^2) = s2 - mean*s1.
    var = (s2 - mean * s1) * (1.0 / (d - 1))
    rstd = jax.lax.rsqrt(var + EPS)                          # EUP rsqrt (free slot)
    a = scale_ref[...].astype(jnp.float32) * rstd            # (rows, D)
    b = shift_ref[...].astype(jnp.float32) - mean * a        # (rows, D)
    o_ref[...] = (a * x + b).astype(o_ref.dtype)


def _beens_layernorm_xla(x, scale, shift):
    """Fused XLA path for shapes where Pallas is a net loss (tiny/lane-sparse
    D) or infeasible (D too large to tile along rows only)."""
    x32 = x.astype(jnp.float32)
    mean = jnp.mean(x32, axis=1, keepdims=True)
    var = jnp.sum((x32 - mean) ** 2, axis=1, keepdims=True) / (x.shape[1] - 1)
    norm = (x32 - mean) / jnp.sqrt(var + EPS)
    out = (scale.reshape(1, -1).astype(jnp.float32) * norm
           + shift.reshape(1, -1).astype(jnp.float32))
    return out.astype(x.dtype)


def _vmem_capacity_bytes():
    """Generation-aware physical VMEM size; conservative 64 MiB (v7x) default."""
    try:
        info = pltpu.get_tpu_info()
        cap = int(getattr(info, "vmem_capacity_bytes", 0))
        if cap > 0:
            return cap
    except Exception:
        pass
    return 64 << 20


def beens_layernorm(x, scale, shift):
    """x: (B, D); scale, shift: (D,). Returns (B, D)."""
    B, D = x.shape
    itemsize = jnp.dtype(x.dtype).itemsize
    # Packed-sublane alignment: 8 rows f32, 16 bf16, 32 int8/fp8.
    pack = 8 * max(1, 4 // itemsize)

    vmem_cap = _vmem_capacity_bytes()
    vmem_budget = int(0.4 * vmem_cap)   # leave headroom for compiler scratch

    # Per-row VMEM cost of one grid step:
    #   in + out blocks double-buffered (2 * 2 * itemsize per element)
    #   + ~4 block-sized f32 intermediates (x upcast, x*x, a, b).
    per_row_bytes = D * (4 * itemsize + 4 * 4)

    rows_by_block = (2 * 1024 * 1024) // max(1, D * itemsize)  # ~2 MiB input blocks
    rows_by_vmem = vmem_budget // max(1, per_row_bytes)
    rows = min(rows_by_block, rows_by_vmem, 512)
    rows = max(pack, (rows // pack) * pack)

    lane_sparse = D < 128
    too_big = per_row_bytes * rows > vmem_budget  # even `pack` rows overflow VMEM

    if lane_sparse or too_big:
        # Lane-sparse D: masked vst.msk partial stores + fixed pallas_call
        # overhead dwarf the work, so XLA's fused layernorm is strictly faster.
        # Huge D would need a D-tiled two-pass kernel.
        # TODO(synk): row-folding layout for D < 128 (pack 128//D rows per lane
        # row with a segmented reduction) and a D-tiled two-pass kernel for very
        # large D are not implemented; fall back to plain XLA instead.
        return _beens_layernorm_xla(x, scale, shift)

    b_pad_min = pl.cdiv(B, pack) * pack
    # Megacore: when everything would fit in 1-2 blocks, still split into up to
    # 4 grid steps so each v7x TensorCore gets >= 2 pipelined steps.  Costs only
    # ~0.35 us per extra step on single-TC chips.
    min_steps = min(4, b_pad_min // pack)
    if min_steps > 1:
        rows = min(rows, max(pack, (b_pad_min // min_steps) // pack * pack))
    rows = min(rows, b_pad_min)

    B_pad = pl.cdiv(B, rows) * rows
    # Ragged batch: zero-pad rows (row-wise reduction, so pad rows cannot
    # contaminate real rows) and slice back afterwards.
    x_in = x if B_pad == B else jnp.pad(x, ((0, B_pad - B), (0, 0)))

    scale2d = scale.reshape(1, D)
    shift2d = shift.reshape(1, D)

    # VMEM budget: double-buffered in + out blocks, f32 intermediates, params,
    # plus slack; capped at half of this generation's physical VMEM.
    block_bytes = rows * D * itemsize
    temp_bytes = 4 * rows * D * 4
    param_bytes = 2 * D * jnp.dtype(scale.dtype).itemsize
    vmem_limit = 4 * block_bytes + temp_bytes + 2 * param_bytes + (2 << 20)
    vmem_limit = int(min(max(vmem_limit, 8 << 20), vmem_cap // 2))

    grid = (B_pad // rows,)
    out = pl.pallas_call(
        _beens_layernorm_kernel,
        out_shape=jax.ShapeDtypeStruct((B_pad, D), x.dtype),
        grid_spec=pltpu.PrefetchScalarGridSpec(
            num_scalar_prefetch=0,
            grid=grid,
            in_specs=[
                pl.BlockSpec((rows, D), lambda i: (i, 0)),
                pl.BlockSpec((1, D), lambda i: (0, 0)),
                pl.BlockSpec((1, D), lambda i: (0, 0)),
            ],
            out_specs=pl.BlockSpec((rows, D), lambda i: (i, 0)),
        ),
        compiler_params=pltpu.CompilerParams(
            dimension_semantics=("parallel",),
            vmem_limit_bytes=vmem_limit,
        ),
    )(x_in, scale2d, shift2d)

    return out[:B] if B_pad != B else out


def beens_layernorm_ref(x, scale, shift):
    """Pure-JAX reference matching the PyTorch module (two-pass, exact)."""
    x32 = x.astype(jnp.float32)
    mean = jnp.mean(x32, axis=1, keepdims=True)
    var = jnp.sum((x32 - mean) ** 2, axis=1, keepdims=True) / (x.shape[1] - 1)
    norm = (x32 - mean) / jnp.sqrt(var + EPS)
    return (scale.reshape(1, -1) * norm + shift.reshape(1, -1)).astype(x.dtype)


if __name__ == "__main__":
    key = jax.random.PRNGKey(0)
    k1, k2, k3 = jax.random.split(key, 3)

    # Primary test: lane-dense hidden dim (Pallas path).
    B, D = 16, 256
    x = jax.random.normal(k1, (B, D), dtype=jnp.float32)
    scale = jnp.ones((D,), dtype=jnp.float32)   # module init: ones
    shift = jnp.ones((D,), dtype=jnp.float32)   # module init: ones
    out = jax.block_until_ready(beens_layernorm(x, scale, shift))
    ref = beens_layernorm_ref(x, scale, shift)
    assert out.shape == (B, D)
    assert float(jnp.max(jnp.abs(out - ref))) < 1e-4

    # Ragged batch: exercises zero-padding + the multi-step grid split.
    B2, D2 = 50, 384
    x2 = jax.random.normal(k2, (B2, D2), dtype=jnp.float32)
    s2 = jnp.ones((D2,), dtype=jnp.float32)
    b2 = jnp.ones((D2,), dtype=jnp.float32)
    out2 = jax.block_until_ready(beens_layernorm(x2, s2, b2))
    ref2 = beens_layernorm_ref(x2, s2, b2)
    assert out2.shape == (B2, D2)
    assert float(jnp.max(jnp.abs(out2 - ref2))) < 1e-4

    # Tiny / lane-sparse D (hidden=32): routed to the fused XLA fallback.
    B3, D3 = 16, 32
    x3 = jax.random.normal(k3, (B3, D3), dtype=jnp.float32)
    s3 = jnp.ones((D3,), dtype=jnp.float32)
    b3 = jnp.ones((D3,), dtype=jnp.float32)
    out3 = jax.block_until_ready(beens_layernorm(x3, s3, b3))
    ref3 = beens_layernorm_ref(x3, s3, b3)
    assert out3.shape == (B3, D3)
    assert float(jnp.max(jnp.abs(out3 - ref3))) < 1e-4

    print("KERNEL_OK")
</pallas_src>

<mosaic_0001>
module attributes {stable_mosaic.version = 11 : i64} {
  func.func @_beens_layernorm_kernel(%arg0: i32, %arg1: memref<8x256xf32, #tpu.memory_space<vmem>>, %arg2: memref<1x256xf32, #tpu.memory_space<vmem>>, %arg3: memref<1x256xf32, #tpu.memory_space<vmem>>, %arg4: memref<8x256xf32, #tpu.memory_space<vmem>>) attributes {dimension_semantics = [#tpu.dimension_semantics<parallel>], iteration_bounds = array<i64: 2>, scalar_prefetch = 0 : i64, scratch_operands = 0 : i64, tpu.core_type = #tpu.core_type<tc>, window_params = [{transform_indices = @transform_0, window_bounds = array<i64: 8, 256>}, {pipeline_mode = #tpu.pipeline_mode<synchronous>, transform_indices = @transform_1, window_bounds = array<i64: 1, 256>}, {pipeline_mode = #tpu.pipeline_mode<synchronous>, transform_indices = @transform_2, window_bounds = array<i64: 1, 256>}, {transform_indices = @transform_3, window_bounds = array<i64: 8, 256>}]} {
    %c0 = arith.constant 0 : index
    %c0_0 = arith.constant 0 : index
    %0 = vector.load %arg1[%c0, %c0_0] : memref<8x256xf32, #tpu.memory_space<vmem>>, vector<8x256xf32>
    %cst = arith.constant dense<0.000000e+00> : vector<8xf32>
    %1 = vector.multi_reduction <add>, %0, %cst [1] : vector<8x256xf32> to vector<8xf32>
    %2 = vector.shape_cast %1 : vector<8xf32> to vector<8x1xf32>
    %3 = arith.mulf %0, %0 : vector<8x256xf32>
    %cst_1 = arith.constant dense<0.000000e+00> : vector<8xf32>
    %4 = vector.multi_reduction <add>, %3, %cst_1 [1] : vector<8x256xf32> to vector<8xf32>
    %5 = vector.shape_cast %4 : vector<8xf32> to vector<8x1xf32>
    %cst_2 = arith.constant 3.906250e-03 : f32
    %6 = vector.broadcast %cst_2 : f32 to vector<8x1xf32>
    %7 = arith.mulf %2, %6 : vector<8x1xf32>
    %8 = arith.mulf %7, %2 : vector<8x1xf32>
    %9 = arith.subf %5, %8 : vector<8x1xf32>
    %cst_3 = arith.constant 0.00392156886 : f32
    %10 = vector.broadcast %cst_3 : f32 to vector<8x1xf32>
    %11 = arith.mulf %9, %10 : vector<8x1xf32>
    %cst_4 = arith.constant 9.99999974E-6 : f32
    %12 = vector.broadcast %cst_4 : f32 to vector<8x1xf32>
    %13 = arith.addf %11, %12 : vector<8x1xf32>
    %14 = math.rsqrt %13 : vector<8x1xf32>
    %c0_5 = arith.constant 0 : index
    %c0_6 = arith.constant 0 : index
    %15 = vector.load %arg2[%c0_5, %c0_6] : memref<1x256xf32, #tpu.memory_space<vmem>>, vector<1x256xf32>
    %16 = vector.broadcast %15 : vector<1x256xf32> to vector<8x256xf32>
    %17 = vector.broadcast %14 : vector<8x1xf32> to vector<8x256xf32>
    %18 = arith.mulf %16, %17 : vector<8x256xf32>
    %c0_7 = arith.constant 0 : index
    %c0_8 = arith.constant 0 : index
    %19 = vector.load %arg3[%c0_7, %c0_8] : memref<1x256xf32, #tpu.memory_space<vmem>>, vector<1x256xf32>
    %20 = vector.broadcast %7 : vector<8x1xf32> to vector<8x256xf32>
    %21 = arith.mulf %20, %18 : vector<8x256xf32>
    %22 = vector.broadcast %19 : vector<1x256xf32> to vector<8x256xf32>
    %23 = arith.subf %22, %21 : vector<8x256xf32>
    %24 = arith.mulf %18, %0 : vector<8x256xf32>
    %25 = arith.addf %24, %23 : vector<8x256xf32>
    %c0_9 = arith.constant 0 : index
    %c0_10 = arith.constant 0 : index
    %26 = vector.load %arg4[%c0_9, %c0_10] : memref<8x256xf32, #tpu.memory_space<vmem>>, vector<8x256xf32>
    tpu.vector_store %arg4[%c0_9, %c0_10], %25 {strides = array<i32>} : memref<8x256xf32, #tpu.memory_space<vmem>>, vector<8x256xf32>,
    return
  }
  func.func @transform_0(%arg0: i32) -> (i32, i32) {
    %c0_i32 = arith.constant 0 : i32
    %c0_i32_0 = arith.constant 0 : i32
    return %arg0, %c0_i32 : i32, i32
  }
  func.func @transform_1(%arg0: i32) -> (i32, i32) {
    %c0_i32 = arith.constant 0 : i32
    %c0_i32_0 = arith.constant 0 : i32
    %c0_i32_1 = arith.constant 0 : i32
    return %c0_i32, %c0_i32_0 : i32, i32
  }
  func.func @transform_2(%arg0: i32) -> (i32, i32) {
    %c0_i32 = arith.constant 0 : i32
    %c0_i32_0 = arith.constant 0 : i32
    %c0_i32_1 = arith.constant 0 : i32
    return %c0_i32, %c0_i32_0 : i32, i32
  }
  func.func @transform_3(%arg0: i32) -> (i32, i32) {
    %c0_i32 = arith.constant 0 : i32
    %c0_i32_0 = arith.constant 0 : i32
    return %arg0, %c0_i32 : i32, i32
  }
}

</mosaic_0001>

<llo_original>
// kernel: tpu_custom_call.1
$region0: #{tpu_custom_call.1}
  #allocation0 [shape = 'u32[]', space=smem, size = 0x4, offset = 0x4, fixed_abs, tag = 'smem constant byte address 0x4 - core index']
  #allocation1 [shape = 'u32[144,128]{1,0:T(1,128)}', space=vmem, size = 0x12000, scoped, tag = 'internal scratch']
  %s0 = inlined_call_operand.hbm [shape: f32[16,256], index: 0, kind: input, shape index: {}]
  %s1 = inlined_call_operand.hbm [shape: f32[1,256], index: 1, kind: input, shape index: {}]
  %s2 = inlined_call_operand.vmem [shape: f32[1,256], index: 2, kind: input, shape index: {}]
  %s3 = inlined_call_operand.hbm [shape: f32[16,256], index: 3, kind: output, shape index: {}]
  %s4 = sld [smem:[#allocation0]]
  $region53: #{tpu_custom_call.1} parent=0
    _
  %s6 = ssub.s32 1, %s4
  %s7 = scalar_select 0, %s6, %s4
  $region1: #{tpu_custom_call.1} parent=0
    #allocation2 [shape = 'u8[16384]{0}', space=vmem, size = 0x4000, scoped, tag = 'input window, operand 0']
    #allocation3 [shape = 's32[2]{0}', space=sflag, size = 0x8, scoped, tag = 'scoped memory for tpu_custom_call.1']
    #allocation4 [shape = 's32[2]{0}', space=sflag, size = 0x8, scoped, tag = 'scoped memory for tpu_custom_call.1']
    #allocation5 [shape = 'u8[1024]{0}', space=vmem, size = 0x400, scoped, tag = 'input window, operand 1, single buffered']
    #allocation6 [shape = 's32[1]{0}', space=sflag, size = 0x4, scoped, tag = 'scoped memory for tpu_custom_call.1']
    #allocation7 [shape = 'u8[16384]{0}', space=vmem, size = 0x4000, scoped, tag = 'output window, operand 0']
    %8 = vsyncpa [#allocation3], 0
    %s9 = scalar_lea.sflag [#allocation3], 1
    %10 = vsyncpa %s9, 0
    %11 = vsyncpa [#allocation6], 0
    %12 = vsyncpa [#allocation4], 0
    %s13 = scalar_lea.sflag [#allocation4], 1
    %14 = vsyncpa %s13, 0
    loop: start=0, step=1, limit=4
    $region2: #{tpu_custom_call.1} parent=1 // loop_pre_header
      _
    $region3: #{tpu_custom_call.1} parent=1 // loop_header
      %s16 = sphi 0, %s20
      %p17 = scmp.ge.s32.totalorder %s16, 4
      %s26 = sphi 0, %s28
      %s29 = sphi 0, %s26
      %s30 = sphi 0, %s29
      %s46 = sphi 0, %s30
      %s50 = sphi 0, %s50
      %s52 = sphi 0, %s50
      %s53 = sphi 0, %s52
      %s67 = sphi 0, %s53
      %s71 = sphi 0, %s71
      %s73 = sphi 0, %s71
      %s74 = sphi 0, %s73
      %s88 = sphi 0, %s74
      %s94 = sphi 0, %s96
      %s97 = sphi 0, %s94
      %s98 = sphi 0, %s97
      %s114 = sphi 0, %s98
    $region4: #{tpu_custom_call.1} parent=1 // loop_header_branch
      %19 = sbr.rel (%p17) target = $region8
    $region5: #{tpu_custom_call.1} parent=1 // loop_body
      %s21 = ssub.s32 %s16, 1
      %s22 = ssub.s32 %s16, 2
      %s23 = sadd.s32 %s16, 1
      %s24 = ssub.s32 %s16, %s23
      %p25 = scmp.eq.s32.totalorder %s24, 0
      %s27 = sadd.s32 %s26, 1
      %s28 = scalar_select %p25, %s26, %s27
      %p31 = pneg %p25
      %p32 = scmp.eq.s32.totalorder %s16, 1
      %p33 = por %p31, %p32
      %p34 = scmp.ne.s32.totalorder %s26, %s29
      %p35 = scmp.eq.s32.totalorder %s16, 0
      %p36 = por %p34, %p35
      %p37 = scmp.ne.s32.totalorder %s26, %s29
      %p38 = scmp.eq.s32.totalorder %s21, 1
      %p39 = por %p37, %p38
      %p40 = scmp.ne.s32.totalorder %s29, %s30
      %p41 = scmp.eq.s32.totalorder %s21, 0
      %p42 = por %p40, %p41
      %p43 = scmp.ne.s32.totalorder %s29, %s30
      %p44 = scmp.eq.s32.totalorder %s22, 1
      %p45 = por %p43, %p44
      %p47 = scmp.ne.s32.totalorder %s30, %s46
      %p48 = scmp.eq.s32.totalorder %s22, 0
      %p49 = por %p47, %p48
      %s51 = sadd.s32 %s50, 1
      %p54 = scmp.eq.s32.totalorder %s16, 1
      %p55 = scmp.ne.s32.totalorder %s50, %s52
      %p56 = scmp.eq.s32.totalorder %s16, 0
      %p57 = por %p55, %p56
      %p58 = scmp.ne.s32.totalorder %s50, %s52
      %p59 = scmp.eq.s32.totalorder %s21, 1
      %p60 = por %p58, %p59
      %p61 = scmp.ne.s32.totalorder %s52, %s53
      %p62 = scmp.eq.s32.totalorder %s21, 0
      %p63 = por %p61, %p62
      %p64 = scmp.ne.s32.totalorder %s52, %s53
      %p65 = scmp.eq.s32.totalorder %s22, 1
      %p66 = por %p64, %p65
      %p68 = scmp.ne.s32.totalorder %s53, %s67
      %p69 = scmp.eq.s32.totalorder %s22, 0
      %p70 = por %p68, %p69
      %s72 = sadd.s32 %s71, 1
      %p75 = scmp.eq.s32.totalorder %s16, 1
      %p76 = scmp.ne.s32.totalorder %s71, %s73
      %p77 = scmp.eq.s32.totalorder %s16, 0
      %p78 = por %p76, %p77
      %p79 = scmp.ne.s32.totalorder %s71, %s73
      %p80 = scmp.eq.s32.totalorder %s21, 1
      %p81 = por %p79, %p80
      %p82 = scmp.ne.s32.totalorder %s73, %s74
      %p83 = scmp.eq.s32.totalorder %s21, 0
      %p84 = por %p82, %p83
      %p85 = scmp.ne.s32.totalorder %s73, %s74
      %p86 = scmp.eq.s32.totalorder %s22, 1
      %p87 = por %p85, %p86
      %p89 = scmp.ne.s32.totalorder %s74, %s88
      %p90 = scmp.eq.s32.totalorder %s22, 0
      %p91 = por %p89, %p90
      %s92 = ssub.s32 %s16, %s23
      %p93 = scmp.eq.s32.totalorder %s92, 0
      %s95 = sadd.s32 %s94, 1
      %s96 = scalar_select %p93, %s94, %s95
      %p99 = pneg %p93
      %p100 = scmp.eq.s32.totalorder %s16, 1
      %p101 = por %p99, %p100
      %p102 = scmp.ne.s32.totalorder %s94, %s97
      %p103 = scmp.eq.s32.totalorder %s16, 0
      %p104 = por %p102, %p103
      %p105 = scmp.ne.s32.totalorder %s94, %s97
      %p106 = scmp.eq.s32.totalorder %s21, 1
      %p107 = por %p105, %p106
      %p108 = scmp.ne.s32.totalorder %s97, %s98
      %p109 = scmp.eq.s32.totalorder %s21, 0
      %p110 = por %p108, %p109
      %p111 = scmp.ne.s32.totalorder %s97, %s98
      %p112 = scmp.eq.s32.totalorder %s22, 1
      %p113 = por %p111, %p112
      %p115 = scmp.ne.s32.totalorder %s98, %s114
      %p116 = scmp.eq.s32.totalorder %s22, 0
      %p117 = por %p115, %p116
      %p118 = scmp.le.s32.totalorder 1, %s16
      %p119 = scmp.lt.s32.totalorder %s16, 3
      %p120 = pnand %p118, %p119
      %p121 = pneg %p120
      // Predicated region
      $region9: #{tpu_custom_call.1} parent=5 // pred_check
        _
      $region10: #{tpu_custom_call.1} parent=5 // pred_check_branch
        %123 = sbr.rel (%p120) target = $region12
      $region11: #{tpu_custom_call.1} parent=5 // pred_region
        %s124 = ssub.s32 %s16, 1
        // Predicated region
        $region13: #{tpu_custom_call.1} parent=11 // pred_check
          %p125 = pneg %p63
        $region14: #{tpu_custom_call.1} parent=11 // pred_check_branch
          %127 = sbr.rel (%p125) target = $region16
        $region15: #{tpu_custom_call.1} parent=11 // pred_region
          %s129 = ssub.s32 32, 32
          %130 = vsyncadd [#allocation6], %s129
          %s132 = sshll.u32 [#allocation5], 4
          %s133 = int_to_ptr.vmem [resolvable:$true] %s132
          %135 = dma.hbm_to_vmem [thread:$0]  %s1, 32, %s133, [#allocation6]
        $region16: #{tpu_custom_call.1} parent=11 // pred_fallthru
          _
        // Predicated region
        $region17: #{tpu_custom_call.1} parent=11 // pred_check
          %p136 = pneg %p84
        $region18: #{tpu_custom_call.1} parent=11 // pred_check_branch
          %138 = sbr.rel (%p136) target = $region20
        $region19: #{tpu_custom_call.1} parent=11 // pred_region
          _
        $region20: #{tpu_custom_call.1} parent=11 // pred_fallthru
          _
      $region12: #{tpu_custom_call.1} parent=5 // pred_fallthru
        _
      %p139 = scmp.lt.s32.totalorder %s16, 2
      // Predicated region
      $region21: #{tpu_custom_call.1} parent=5 // pred_check
        %p140 = pneg %p139
      $region22: #{tpu_custom_call.1} parent=5 // pred_check_branch
        %142 = sbr.rel (%p140) target = $region24
      $region23: #{tpu_custom_call.1} parent=5 // pred_region
        // Predicated region
        $region25: #{tpu_custom_call.1} parent=23 // pred_check
          %p143 = pneg %p36
        $region26: #{tpu_custom_call.1} parent=23 // pred_check_branch
          %145 = sbr.rel (%p143) target = $region28
        $region27: #{tpu_custom_call.1} parent=23 // pred_region
          %s146 = sand.u32 %s26, 1
          %s147 = scalar_lea.sflag [#allocation3], %s146
          %s148 = sand.u32 %s26, 1
          %s149 = smul.addr %s148, 16
          %s150 = scalar_lea.vmem [#allocation2], %s149
          %s152 = ssub.s32 256, 256
          %153 = vsyncadd %s147, %s152
          %s154 = smul.addr %s16, 2
          %s155 = smul.addr %s154, 128
          %s156 = scalar_lea.hbm %s0, %s155
          %s158 = sshll.u32 %s150, 4
          %s159 = int_to_ptr.vmem [resolvable:$true] %s158
          %161 = dma.hbm_to_vmem [thread:$0]  %s156, 256, %s159, %s147
        $region28: #{tpu_custom_call.1} parent=23 // pred_fallthru
          _
      $region24: #{tpu_custom_call.1} parent=5 // pred_fallthru
        _
      %p162 = scmp.le.s32.totalorder 1, %s16
      %p163 = scmp.lt.s32.totalorder %s16, 3
      %p164 = pnand %p162, %p163
      %p165 = pneg %p164
      // Predicated region
      $region29: #{tpu_custom_call.1} parent=5 // pred_check
        _
      $region30: #{tpu_custom_call.1} parent=5 // pred_check_branch
        %167 = sbr.rel (%p164) target = $region32
      $region31: #{tpu_custom_call.1} parent=5 // pred_region
        %s168 = ssub.s32 %s16, 1
        %s169 = sand.u32 %s29, 1
        %s170 = scalar_lea.sflag [#allocation3], %s169
        %s171 = sand.u32 %s29, 1
        %s172 = smul.addr %s171, 16
        %s173 = scalar_lea.vmem [#allocation2], %s172
        // Predicated region
        $region33: #{tpu_custom_call.1} parent=31 // pred_check
          %p174 = pneg %p42
        $region34: #{tpu_custom_call.1} parent=31 // pred_check_branch
          %176 = sbr.rel (%p174) target = $region36
        $region35: #{tpu_custom_call.1} parent=31 // pred_region
          %177 = dma.done %s170, 256
        $region36: #{tpu_custom_call.1} parent=31 // pred_fallthru
          _
        // Predicated region
        $region37: #{tpu_custom_call.1} parent=31 // pred_check
          %p178 = pneg %p63
        $region38: #{tpu_custom_call.1} parent=31 // pred_check_branch
          %180 = sbr.rel (%p178) target = $region40
        $region39: #{tpu_custom_call.1} parent=31 // pred_region
          %181 = dma.done [#allocation6], 32
        $region40: #{tpu_custom_call.1} parent=31 // pred_fallthru
          _
        %s182 = sand.u32 %s29, 1
        %s183 = scalar_lea.sflag [#allocation3], %s182
        %s184 = sand.u32 %s29, 1
        %s185 = smul.addr %s184, 16
        %s186 = scalar_lea.vmem [#allocation2], %s185
        %p187 = pneg %p42
        %p188 = pneg %p39
        %p189 = pneg %p63
        %p190 = pneg %p60
        %p191 = pneg %p84
        %p192 = pneg %p81
        %p193 = pneg %p110
        %p194 = pneg %p107
        %s195 = sand.u32 %s97, 1
        %s196 = scalar_lea.sflag [#allocation4], %s195
        %s197 = sand.u32 %s97, 1
        %s198 = smul.addr %s197, 16
        %s199 = scalar_lea.vmem [#allocation7], %s198
        %v200 = vld [vmem:[%s173] sm:$0xff]
        %v201 = vld [vmem:[%s173 + $0x8] sm:$0xff]
        %v202 = vadd.f32 %v200, %v201
        %203 = vadd.xlane.f32.xlu0 %v202
        %v204 = vpop.xlane.xlu0 %203
        %v205 = vmul.f32 %v200, %v200
        %v206 = vmul.f32 %v201, %v201
        %v207 = vadd.f32 %v205, %v206
        %208 = vadd.xlane.f32.xlu0 %v207
        %v209 = vpop.xlane.xlu0 %208
        %v210 = vmul.f32 %v204, 0.00390625
        %v211 = vmul.f32 %v210, %v204
        %v212 = vsub.f32 %v209, %v211
        %v213 = vmul.f32 %v212, 0.003921569
        %v214 = vadd.f32 %v213, 1e-05
        %v215 = vrsqrt.pop %v214
        %v216 = vld [vmem:[#allocation5] sm:$0x3]
        %v218 = vlaneseq
        %v219 = vshrl.u32 %v218, 7
        %v220 = vsub.s32 0, %v219
        %v221 = vrot.slane %v216, %v220
        %v222 = vlaneseq
        %v223 = vshrl.u32 %v222, 7
        %v224 = vsub.s32 1, %v223
        %v225 = vrot.slane %v216, %v224
        %v228 = vmul.f32 %v221, %v215
        %v229 = vmul.f32 %v225, %v215
        %v230 = vld [vmem:[%s2] sm:$0x3]
        %v231 = vmul.f32 %v210, %v228
        %v232 = vmul.f32 %v210, %v229
        %v234 = vlaneseq
        %v235 = vshrl.u32 %v234, 7
        %v236 = vsub.s32 0, %v235
        %v237 = vrot.slane %v230, %v236
        %v238 = vlaneseq
        %v239 = vshrl.u32 %v238, 7
        %v240 = vsub.s32 1, %v239
        %v241 = vrot.slane %v230, %v240
        %v244 = vsub.f32 %v237, %v231
        %v245 = vsub.f32 %v241, %v232
        %v246 = vmul.f32 %v228, %v200
        %v247 = vmul.f32 %v229, %v201
        %v248 = vadd.f32 %v246, %v244
        %v249 = vadd.f32 %v247, %v245
        %250 = vst [vmem:[%s199] sm:$0xff] %v248
        %251 = vst [vmem:[%s199 + $0x8] sm:$0xff] %v249
        %s252 = sand.u32 %s97, 1
        %s253 = scalar_lea.sflag [#allocation4], %s252
        %s254 = sand.u32 %s97, 1
        %s255 = smul.addr %s254, 16
        %s256 = scalar_lea.vmem [#allocation7], %s255
        // Predicated region
        $region41: #{tpu_custom_call.1} parent=31 // pred_check
          %p257 = pneg %p107
        $region42: #{tpu_custom_call.1} parent=31 // pred_check_branch
          %259 = sbr.rel (%p257) target = $region44
        $region43: #{tpu_custom_call.1} parent=31 // pred_region
          %s261 = ssub.s32 256, 256
          %262 = vsyncadd %s253, %s261
          %s263 = smul.addr %s21, 2
          %s264 = smul.addr %s263, 128
          %s265 = scalar_lea.hbm %s3, %s264
          %s267 = sshll.u32 %s256, 4
          %s268 = int_to_ptr.vmem [resolvable:$true] %s267
          %270 = dma.vmem_to_hbm [thread:$0]  %s268, 256, %s265, %s253
        $region44: #{tpu_custom_call.1} parent=31 // pred_fallthru
          _
      $region32: #{tpu_custom_call.1} parent=5 // pred_fallthru
        _
      %p271 = scmp.le.s32.totalorder 2, %s16
      // Predicated region
      $region45: #{tpu_custom_call.1} parent=5 // pred_check
        %p272 = pneg %p271
      $region46: #{tpu_custom_call.1} parent=5 // pred_check_branch
        %274 = sbr.rel (%p272) target = $region48
      $region47: #{tpu_custom_call.1} parent=5 // pred_region
        %s275 = ssub.s32 %s16, 2
        // Predicated region
        $region49: #{tpu_custom_call.1} parent=47 // pred_check
          %p276 = pneg %p113
        $region50: #{tpu_custom_call.1} parent=47 // pred_check_branch
          %278 = sbr.rel (%p276) target = $region52
        $region51: #{tpu_custom_call.1} parent=47 // pred_region
          %s279 = sand.u32 %s98, 1
          %s280 = scalar_lea.sflag [#allocation4], %s279
          %s281 = sand.u32 %s98, 1
          %s282 = smul.addr %s281, 16
          %s283 = scalar_lea.vmem [#allocation7], %s282
          %284 = dma.done %s280, 256
        $region52: #{tpu_custom_call.1} parent=47 // pred_fallthru
          _
      $region48: #{tpu_custom_call.1} parent=5 // pred_fallthru
        _
    $region6: #{tpu_custom_call.1} parent=1 // loop_footer
      %s20 = sadd.s32 1, %s16
    $region7: #{tpu_custom_call.1} parent=1 // loop_footer_branch
      %15 = sbr.rel target = $region3
    $region8: #{tpu_custom_call.1} parent=1 // loop_exit
      _
    %285 = vsyncpa [#allocation3], 1
    %s286 = scalar_lea.sflag [#allocation3], 1
    %287 = vsyncpa %s286, 1
    %288 = vsyncpa [#allocation6], 1
    %289 = vsyncpa [#allocation4], 1
    %s290 = scalar_lea.sflag [#allocation4], 1
    %291 = vsyncpa %s290, 1

</llo_original>
